<compile_context>
chip_gen: v7x
topology: tpu7x:2x2x1
jax: 0.10.0
libtpu: 0.0.40
codegen_flags: <defaults>
</compile_context>

<pallas_src>
import jax
import jax.numpy as jnp
from jax.experimental import pallas as pl
from jax.experimental.pallas import tpu as pltpu


def _round_up(x, m):
    return (x + m - 1) // m * m


def dqn_kernel(x_ref, w1_ref, b1_ref, w2_ref, b2_ref, w3_ref, b3_ref,
               o_ref, acc_ref):
    k = pl.program_id(1)

    @pl.when(k == 0)
    def _():
        acc_ref[...] = jnp.zeros_like(acc_ref)

    # Layer 1 partial product for this K tile (bf16 x bf16 -> f32 accumulate).
    acc_ref[...] += jnp.dot(x_ref[...], w1_ref[...],
                            preferred_element_type=jnp.float32)

    @pl.when(k == pl.num_programs(1) - 1)
    def _():
        h1 = jnp.maximum(acc_ref[...] + b1_ref[...], 0.0)
        h2 = jnp.dot(h1.astype(w2_ref.dtype), w2_ref[...],
                     preferred_element_type=jnp.float32) + b2_ref[...]
        h2 = jnp.maximum(h2, 0.0)
        out = jnp.dot(h2.astype(w3_ref.dtype), w3_ref[...],
                      preferred_element_type=jnp.float32) + b3_ref[...]
        o_ref[...] = out.astype(o_ref.dtype)


def dqn_forward(x, params, *, batch_tile=128, k_tile=2048):
    """Fused DQN forward.  params = (w1, b1, w2, b2, w3, b3); weights bf16
    with shape (in, out), biases f32 with shape (1, out)."""
    w1, b1, w2, b2, w3, b3 = params
    B, K = x.shape
    H1 = w1.shape[1]            # 128
    H2 = w2.shape[1]            # 256
    n_actions = w3.shape[1]
    compute_dtype = w1.dtype    # bf16

    # --- padding for lane-dense / tile-friendly shapes -----------------------
    n_out = _round_up(n_actions, 128)               # lane-dense output width
    bt = min(batch_tile, _round_up(B, 16))          # bf16 sublane packing = 16
    b_pad = _round_up(B, bt)
    tk = min(k_tile, _round_up(K, 128))
    k_pad = _round_up(K, tk)

    x_p = jnp.zeros((b_pad, k_pad), compute_dtype).at[:B, :K].set(
        x.astype(compute_dtype))
    w1_p = jnp.zeros((k_pad, H1), compute_dtype).at[:K, :].set(w1)
    w3_p = jnp.zeros((H2, n_out), compute_dtype).at[:, :n_actions].set(w3)
    b3_p = jnp.zeros((1, n_out), jnp.float32).at[:, :n_actions].set(b3)

    nb = b_pad // bt
    nk = k_pad // tk

    # --- cost estimate (helps XLA scheduling around the custom call) ---------
    flops = 2 * b_pad * (k_pad * H1 + H1 * H2 + H2 * n_out)
    bytes_accessed = (x_p.size * 2 + w1_p.size * 2 + w2.size * 2 +
                      w3_p.size * 2 + (b1.size + b2.size + b3_p.size) * 4 +
                      b_pad * n_out * 4)
    cost = pl.CostEstimate(flops=flops, transcendentals=0,
                           bytes_accessed=bytes_accessed)

    out = pl.pallas_call(
        dqn_kernel,
        out_shape=jax.ShapeDtypeStruct((b_pad, n_out), jnp.float32),
        grid_spec=pltpu.PrefetchScalarGridSpec(
            num_scalar_prefetch=0,
            grid=(nb, nk),                                   # K (reduction) last
            in_specs=[
                pl.BlockSpec((bt, tk), lambda b, k: (b, k)),     # x tile
                pl.BlockSpec((tk, H1), lambda b, k: (k, 0)),     # w1 K-tile
                pl.BlockSpec((1, H1), lambda b, k: (0, 0)),      # b1 (resident)
                pl.BlockSpec((H1, H2), lambda b, k: (0, 0)),     # w2 (resident)
                pl.BlockSpec((1, H2), lambda b, k: (0, 0)),      # b2 (resident)
                pl.BlockSpec((H2, n_out), lambda b, k: (0, 0)),  # w3 (resident)
                pl.BlockSpec((1, n_out), lambda b, k: (0, 0)),   # b3 (resident)
            ],
            out_specs=pl.BlockSpec((bt, n_out), lambda b, k: (b, 0)),
            scratch_shapes=[pltpu.VMEM((bt, H1), jnp.float32)],  # layer-1 acc
        ),
        compiler_params=pltpu.CompilerParams(
            dimension_semantics=("parallel", "arbitrary"),
            vmem_limit_bytes=32 * 1024 * 1024,
        ),
        cost_estimate=cost,
    )(x_p, w1_p, b1, w2, b2, w3_p, b3_p)

    return out[:B, :n_actions]


def init_linear(key, fan_in, fan_out):
    # Mimics PyTorch nn.Linear default init: U(-1/sqrt(fan_in), 1/sqrt(fan_in)).
    kw, kb = jax.random.split(key)
    bound = 1.0 / jnp.sqrt(jnp.float32(fan_in))
    w = jax.random.uniform(kw, (fan_in, fan_out), jnp.float32, -bound, bound)
    b = jax.random.uniform(kb, (1, fan_out), jnp.float32, -bound, bound)
    return w.astype(jnp.bfloat16), b        # bf16 weights, f32 biases


if __name__ == "__main__":
    # Small, module-consistent shapes: batch=8, in_features=640, n_actions=6.
    # (Reference module uses in_features=210*160*3 and the env action count;
    #  shrunk here but the K-tiled grid path is still exercised.)
    # TODO(synk): gym env / replay buffer / training loop are outside the
    # forward pass and are not translated.
    key = jax.random.PRNGKey(0)
    k_x, k1, k2, k3 = jax.random.split(key, 4)

    batch = 8
    in_features = 640
    n_actions = 6

    w1, b1 = init_linear(k1, in_features, 128)
    w2, b2 = init_linear(k2, 128, 256)
    w3, b3 = init_linear(k3, 256, n_actions)
    params = (w1, b1, w2, b2, w3, b3)

    x = jax.random.normal(k_x, (batch, in_features), jnp.float32)

    # Small k_tile so the accumulation grid axis has >1 step in this test.
    out = dqn_forward(x, params, k_tile=256)
    jax.block_until_ready(out)

    # Pure-JAX reference with the same bf16 inputs / f32 accumulation.
    xf = x.astype(jnp.bfloat16).astype(jnp.float32)
    w1f = w1.astype(jnp.float32)
    w2f = w2.astype(jnp.float32)
    w3f = w3.astype(jnp.float32)
    h1 = jnp.maximum(xf @ w1f + b1, 0.0)
    h1 = h1.astype(jnp.bfloat16).astype(jnp.float32)
    h2 = jnp.maximum(h1 @ w2f + b2, 0.0)
    h2 = h2.astype(jnp.bfloat16).astype(jnp.float32)
    ref = h2 @ w3f + b3

    assert out.shape == (batch, n_actions)
    assert jnp.allclose(out, ref, atol=1e-3, rtol=1e-3), (
        float(jnp.max(jnp.abs(out - ref))))

    print("KERNEL_OK")
</pallas_src>

<mosaic_0001>
module attributes {stable_mosaic.version = 11 : i64} {
  func.func @dqn_kernel(%arg0: i32, %arg1: i32, %arg2: memref<16x256xbf16, #tpu.memory_space<vmem>>, %arg3: memref<256x128xbf16, #tpu.memory_space<vmem>>, %arg4: memref<1x128xf32, #tpu.memory_space<vmem>>, %arg5: memref<128x256xbf16, #tpu.memory_space<vmem>>, %arg6: memref<1x256xf32, #tpu.memory_space<vmem>>, %arg7: memref<256x128xbf16, #tpu.memory_space<vmem>>, %arg8: memref<1x128xf32, #tpu.memory_space<vmem>>, %arg9: memref<16x128xf32, #tpu.memory_space<vmem>>, %arg10: memref<16x128xf32, #tpu.memory_space<vmem>>) attributes {dimension_semantics = [#tpu.dimension_semantics<parallel>, #tpu.dimension_semantics<arbitrary>], iteration_bounds = array<i64: 1, 3>, scalar_prefetch = 0 : i64, scratch_operands = 1 : i64, tpu.core_type = #tpu.core_type<tc>, window_params = [{transform_indices = @transform_0, window_bounds = array<i64: 16, 256>}, {transform_indices = @transform_1, window_bounds = array<i64: 256, 128>}, {pipeline_mode = #tpu.pipeline_mode<synchronous>, transform_indices = @transform_2, window_bounds = array<i64: 1, 128>}, {pipeline_mode = #tpu.pipeline_mode<synchronous>, transform_indices = @transform_3, window_bounds = array<i64: 128, 256>}, {pipeline_mode = #tpu.pipeline_mode<synchronous>, transform_indices = @transform_4, window_bounds = array<i64: 1, 256>}, {pipeline_mode = #tpu.pipeline_mode<synchronous>, transform_indices = @transform_5, window_bounds = array<i64: 256, 128>}, {pipeline_mode = #tpu.pipeline_mode<synchronous>, transform_indices = @transform_6, window_bounds = array<i64: 1, 128>}, {transform_indices = @transform_7, window_bounds = array<i64: 16, 128>}]} {
    %c0_i32 = arith.constant 0 : i32
    %0 = arith.cmpi eq, %arg1, %c0_i32 : i32
    %1 = arith.extui %0 : i1 to i32
    %c0_i32_0 = arith.constant 0 : i32
    %2 = arith.cmpi ne, %1, %c0_i32_0 : i32
    scf.if %2 {
      %cst_9 = arith.constant 0.000000e+00 : f32
      %12 = vector.broadcast %cst_9 : f32 to vector<16x128xf32>
      %c0_10 = arith.constant 0 : index
      %c0_11 = arith.constant 0 : index
      %13 = vector.load %arg10[%c0_10, %c0_11] : memref<16x128xf32, #tpu.memory_space<vmem>>, vector<16x128xf32>
      tpu.vector_store %arg10[%c0_10, %c0_11], %12 {strides = array<i32>} : memref<16x128xf32, #tpu.memory_space<vmem>>, vector<16x128xf32>,
    } else {
    }
    %c0 = arith.constant 0 : index
    %c0_1 = arith.constant 0 : index
    %3 = vector.load %arg10[%c0, %c0_1] : memref<16x128xf32, #tpu.memory_space<vmem>>, vector<16x128xf32>
    %c0_2 = arith.constant 0 : index
    %c0_3 = arith.constant 0 : index
    %4 = vector.load %arg2[%c0_2, %c0_3] : memref<16x256xbf16, #tpu.memory_space<vmem>>, vector<16x256xbf16>
    %c0_4 = arith.constant 0 : index
    %c0_5 = arith.constant 0 : index
    %5 = vector.load %arg3[%c0_4, %c0_5] : memref<256x128xbf16, #tpu.memory_space<vmem>>, vector<256x128xbf16>
    %cst = arith.constant dense<0.000000e+00> : vector<16x128xf32>
    %6 = tpu.matmul %4, %5, %cst {dimension_numbers = #tpu.dot_dimension_numbers<[1], [0], [0], [1], [0, 0, 1, 1], [], []>} : vector<16x256xbf16>, vector<256x128xbf16>, vector<16x128xf32> -> vector<16x128xf32>
    %7 = arith.addf %3, %6 : vector<16x128xf32>
    %c0_6 = arith.constant 0 : index
    %c0_7 = arith.constant 0 : index
    %8 = vector.load %arg10[%c0_6, %c0_7] : memref<16x128xf32, #tpu.memory_space<vmem>>, vector<16x128xf32>
    tpu.vector_store %arg10[%c0_6, %c0_7], %7 {strides = array<i32>} : memref<16x128xf32, #tpu.memory_space<vmem>>, vector<16x128xf32>,
    %c2_i32 = arith.constant 2 : i32
    %9 = arith.cmpi eq, %arg1, %c2_i32 : i32
    %10 = arith.extui %9 : i1 to i32
    %c0_i32_8 = arith.constant 0 : i32
    %11 = arith.cmpi ne, %10, %c0_i32_8 : i32
    scf.if %11 {
      %c0_9 = arith.constant 0 : index
      %c0_10 = arith.constant 0 : index
      %12 = vector.load %arg10[%c0_9, %c0_10] : memref<16x128xf32, #tpu.memory_space<vmem>>, vector<16x128xf32>
      %c0_11 = arith.constant 0 : index
      %c0_12 = arith.constant 0 : index
      %13 = vector.load %arg4[%c0_11, %c0_12] : memref<1x128xf32, #tpu.memory_space<vmem>>, vector<1x128xf32>
      %14 = vector.broadcast %13 : vector<1x128xf32> to vector<16x128xf32>
      %15 = arith.addf %12, %14 : vector<16x128xf32>
      %cst_13 = arith.constant 0.000000e+00 : f32
      %16 = vector.broadcast %cst_13 : f32 to vector<16x128xf32>
      %17 = arith.maximumf %15, %16 : vector<16x128xf32>
      %18 = arith.truncf %17 : vector<16x128xf32> to vector<16x128xbf16>
      %c0_14 = arith.constant 0 : index
      %c0_15 = arith.constant 0 : index
      %19 = vector.load %arg5[%c0_14, %c0_15] : memref<128x256xbf16, #tpu.memory_space<vmem>>, vector<128x256xbf16>
      %cst_16 = arith.constant dense<0.000000e+00> : vector<16x256xf32>
      %20 = tpu.matmul %18, %19, %cst_16 {dimension_numbers = #tpu.dot_dimension_numbers<[1], [0], [0], [1], [0, 0, 1, 1], [], []>} : vector<16x128xbf16>, vector<128x256xbf16>, vector<16x256xf32> -> vector<16x256xf32>
      %c0_17 = arith.constant 0 : index
      %c0_18 = arith.constant 0 : index
      %21 = vector.load %arg6[%c0_17, %c0_18] : memref<1x256xf32, #tpu.memory_space<vmem>>, vector<1x256xf32>
      %22 = vector.broadcast %21 : vector<1x256xf32> to vector<16x256xf32>
      %23 = arith.addf %20, %22 : vector<16x256xf32>
      %cst_19 = arith.constant 0.000000e+00 : f32
      %24 = vector.broadcast %cst_19 : f32 to vector<16x256xf32>
      %25 = arith.maximumf %23, %24 : vector<16x256xf32>
      %26 = arith.truncf %25 : vector<16x256xf32> to vector<16x256xbf16>
      %c0_20 = arith.constant 0 : index
      %c0_21 = arith.constant 0 : index
      %27 = vector.load %arg7[%c0_20, %c0_21] : memref<256x128xbf16, #tpu.memory_space<vmem>>, vector<256x128xbf16>
      %cst_22 = arith.constant dense<0.000000e+00> : vector<16x128xf32>
      %28 = tpu.matmul %26, %27, %cst_22 {dimension_numbers = #tpu.dot_dimension_numbers<[1], [0], [0], [1], [0, 0, 1, 1], [], []>} : vector<16x256xbf16>, vector<256x128xbf16>, vector<16x128xf32> -> vector<16x128xf32>
      %c0_23 = arith.constant 0 : index
      %c0_24 = arith.constant 0 : index
      %29 = vector.load %arg8[%c0_23, %c0_24] : memref<1x128xf32, #tpu.memory_space<vmem>>, vector<1x128xf32>
      %30 = vector.broadcast %29 : vector<1x128xf32> to vector<16x128xf32>
      %31 = arith.addf %28, %30 : vector<16x128xf32>
      %c0_25 = arith.constant 0 : index
      %c0_26 = arith.constant 0 : index
      %32 = vector.load %arg9[%c0_25, %c0_26] : memref<16x128xf32, #tpu.memory_space<vmem>>, vector<16x128xf32>
      tpu.vector_store %arg9[%c0_25, %c0_26], %31 {strides = array<i32>} : memref<16x128xf32, #tpu.memory_space<vmem>>, vector<16x128xf32>,
    } else {
    }
    return
  }
  func.func @transform_0(%arg0: i32, %arg1: i32) -> (i32, i32) {
    %c0_i32 = arith.constant 0 : i32
    return %arg0, %arg1 : i32, i32
  }
  func.func @transform_1(%arg0: i32, %arg1: i32) -> (i32, i32) {
    %c0_i32 = arith.constant 0 : i32
    %c0_i32_0 = arith.constant 0 : i32
    return %arg1, %c0_i32 : i32, i32
  }
  func.func @transform_2(%arg0: i32, %arg1: i32) -> (i32, i32) {
    %c0_i32 = arith.constant 0 : i32
    %c0_i32_0 = arith.constant 0 : i32
    %c0_i32_1 = arith.constant 0 : i32
    return %c0_i32, %c0_i32_0 : i32, i32
  }
  func.func @transform_3(%arg0: i32, %arg1: i32) -> (i32, i32) {
    %c0_i32 = arith.constant 0 : i32
    %c0_i32_0 = arith.constant 0 : i32
    %c0_i32_1 = arith.constant 0 : i32
    return %c0_i32, %c0_i32_0 : i32, i32
  }
  func.func @transform_4(%arg0: i32, %arg1: i32) -> (i32, i32) {
    %c0_i32 = arith.constant 0 : i32
    %c0_i32_0 = arith.constant 0 : i32
    %c0_i32_1 = arith.constant 0 : i32
    return %c0_i32, %c0_i32_0 : i32, i32
  }
  func.func @transform_5(%arg0: i32, %arg1: i32) -> (i32, i32) {
    %c0_i32 = arith.constant 0 : i32
    %c0_i32_0 = arith.constant 0 : i32
    %c0_i32_1 = arith.constant 0 : i32
    return %c0_i32, %c0_i32_0 : i32, i32
  }
  func.func @transform_6(%arg0: i32, %arg1: i32) -> (i32, i32) {
    %c0_i32 = arith.constant 0 : i32
    %c0_i32_0 = arith.constant 0 : i32
    %c0_i32_1 = arith.constant 0 : i32
    return %c0_i32, %c0_i32_0 : i32, i32
  }
  func.func @transform_7(%arg0: i32, %arg1: i32) -> (i32, i32) {
    %c0_i32 = arith.constant 0 : i32
    %c0_i32_0 = arith.constant 0 : i32
    return %arg0, %c0_i32 : i32, i32
  }
}

</mosaic_0001>

<llo_original>
// kernel: tpu_custom_call.1
$region0: #{tpu_custom_call.1}
  #allocation0 [shape = 'u32[]', space=smem, size = 0x4, offset = 0x4, fixed_abs, tag = 'smem constant byte address 0x4 - core index']
  #allocation1 [shape = 'u32[144,128]{1,0:T(1,128)}', space=vmem, size = 0x12000, scoped, tag = 'internal scratch']
  #allocation2 [shape = 'f32[16,128]{1,0:T(8,128)}', space=vmem, size = 0x2000, scoped, tag = 'scratch operand']
  %s0 = inlined_call_operand.hbm [shape: bf16[16,768], index: 0, kind: input, shape index: {}]
  %s1 = inlined_call_operand.hbm [shape: bf16[768,128], index: 1, kind: input, shape index: {}]
  %s2 = inlined_call_operand.vmem [shape: f32[1,128], index: 2, kind: input, shape index: {}]
  %s3 = inlined_call_operand.hbm [shape: bf16[128,256], index: 3, kind: input, shape index: {}]
  %s4 = inlined_call_operand.vmem [shape: f32[1,256], index: 4, kind: input, shape index: {}]
  %s5 = inlined_call_operand.hbm [shape: bf16[256,128], index: 5, kind: input, shape index: {}]
  %s6 = inlined_call_operand.vmem [shape: f32[1,128], index: 6, kind: input, shape index: {}]
  %s7 = inlined_call_operand.hbm [shape: f32[16,128], index: 7, kind: output, shape index: {}]
  %s8 = sld [smem:[#allocation0]]
  $region85: #{tpu_custom_call.1} parent=0
    _
  %s10 = ssub.s32 1, %s8
  %s11 = scalar_select 0, %s10, %s8
  $region1: #{tpu_custom_call.1} parent=0
    #allocation3 [shape = 'u8[16384]{0}', space=vmem, size = 0x4000, scoped, tag = 'input window, operand 0']
    #allocation4 [shape = 's32[2]{0}', space=sflag, size = 0x8, scoped, tag = 'scoped memory for tpu_custom_call.1']
    #allocation5 [shape = 's32[2]{0}', space=sflag, size = 0x8, scoped, tag = 'scoped memory for tpu_custom_call.1']
    #allocation6 [shape = 'u8[131072]{0}', space=vmem, size = 0x20000, scoped, tag = 'input window, operand 1']
    #allocation7 [shape = 's32[2]{0}', space=sflag, size = 0x8, scoped, tag = 'scoped memory for tpu_custom_call.1']
    #allocation8 [shape = 'u8[65536]{0}', space=vmem, size = 0x10000, scoped, tag = 'input window, operand 3, single buffered']
    #allocation9 [shape = 'u8[65536]{0}', space=vmem, size = 0x10000, scoped, tag = 'input window, operand 5, single buffered']
    #allocation10 [shape = 's32[1]{0}', space=sflag, size = 0x4, scoped, tag = 'scoped memory for tpu_custom_call.1']
    #allocation11 [shape = 'u8[8192]{0}', space=vmem, size = 0x2000, scoped, tag = 'output window, operand 0, single buffered']
    %12 = vsyncpa [#allocation4], 0
    %s13 = scalar_lea.sflag [#allocation4], 1
    %14 = vsyncpa %s13, 0
    %15 = vsyncpa [#allocation7], 0
    %s16 = scalar_lea.sflag [#allocation7], 1
    %17 = vsyncpa %s16, 0
    %18 = vsyncpa [#allocation10], 0
    %19 = vsyncpa [#allocation5], 0
    loop: start=0, step=1, limit=5
    $region2: #{tpu_custom_call.1} parent=1 // loop_pre_header
      _
    $region3: #{tpu_custom_call.1} parent=1 // loop_header
      %s21 = sphi 0, %s25
      %p22 = scmp.ge.s32.totalorder %s21, 5
      %s28 = sphi 0, %s40
      %s29 = sphi 0, %s36
      %s30 = sphi 0, %s28
      %s31 = sphi 0, %s29
      %s32 = sphi 0, %s30
      %s33 = sphi 0, %s31
      %s45 = sphi 0, %s47
      %s48 = sphi 0, %s45
      %s49 = sphi 0, %s48
      %s65 = sphi 0, %s49
      %s71 = sphi 0, %s73
      %s74 = sphi 0, %s71
      %s75 = sphi 0, %s74
      %s91 = sphi 0, %s75
      %s95 = sphi 0, %s95
      %s97 = sphi 0, %s95
      %s98 = sphi 0, %s97
      %s112 = sphi 0, %s98
      %s116 = sphi 0, %s116
      %s118 = sphi 0, %s116
      %s119 = sphi 0, %s118
      %s133 = sphi 0, %s119
      %s137 = sphi 0, %s137
      %s139 = sphi 0, %s137
      %s140 = sphi 0, %s139
      %s154 = sphi 0, %s140
      %s158 = sphi 0, %s158
      %s160 = sphi 0, %s158
      %s161 = sphi 0, %s160
      %s175 = sphi 0, %s161
      %s179 = sphi 0, %s179
      %s181 = sphi 0, %s179
      %s182 = sphi 0, %s181
      %s196 = sphi 0, %s182
      %s202 = sphi 0, %s204
      %s205 = sphi 0, %s202
      %s206 = sphi 0, %s205
      %s222 = sphi 0, %s206
    $region4: #{tpu_custom_call.1} parent=1 // loop_header_branch
      %24 = sbr.rel (%p22) target = $region8
    $region5: #{tpu_custom_call.1} parent=1 // loop_body
      %s26 = ssub.s32 %s21, 1
      %s27 = ssub.s32 %s21, 2
      %s34 = sadd.s32 1, %s29
      %p35 = scmp.ge.s32.totalorder %s34, 3
      %s36 = scalar_select %p35, 0, %s34
      %s37 = sadd.s32 1, %s28
      %s38 = scalar_select %p35, %s37, %s28
      %p39 = scmp.ge.s32.totalorder %s38, 1
      %s40 = scalar_select %p39, 0, %s38
      %s41 = ssub.s32 %s28, %s40
      %s42 = ssub.s32 %s29, %s36
      %s43 = sor.u32 %s41, %s42
      %p44 = scmp.eq.s32.totalorder %s43, 0
      %s46 = sadd.s32 %s45, 1
      %s47 = scalar_select %p44, %s45, %s46
      %p50 = pneg %p44
      %p51 = scmp.eq.s32.totalorder %s21, 2
      %p52 = por %p50, %p51
      %p53 = scmp.ne.s32.totalorder %s45, %s48
      %p54 = scmp.eq.s32.totalorder %s21, 0
      %p55 = por %p53, %p54
      %p56 = scmp.ne.s32.totalorder %s45, %s48
      %p57 = scmp.eq.s32.totalorder %s26, 2
      %p58 = por %p56, %p57
      %p59 = scmp.ne.s32.totalorder %s48, %s49
      %p60 = scmp.eq.s32.totalorder %s26, 0
      %p61 = por %p59, %p60
      %p62 = scmp.ne.s32.totalorder %s48, %s49
      %p63 = scmp.eq.s32.totalorder %s27, 2
      %p64 = por %p62, %p63
      %p66 = scmp.ne.s32.totalorder %s49, %s65
      %p67 = scmp.eq.s32.totalorder %s27, 0
      %p68 = por %p66, %p67
      %s69 = ssub.s32 %s29, %s36
      %p70 = scmp.eq.s32.totalorder %s69, 0
      %s72 = sadd.s32 %s71, 1
      %s73 = scalar_select %p70, %s71, %s72
      %p76 = pneg %p70
      %p77 = scmp.eq.s32.totalorder %s21, 2
      %p78 = por %p76, %p77
      %p79 = scmp.ne.s32.totalorder %s71, %s74
      %p80 = scmp.eq.s32.totalorder %s21, 0
      %p81 = por %p79, %p80
      %p82 = scmp.ne.s32.totalorder %s71, %s74
      %p83 = scmp.eq.s32.totalorder %s26, 2
      %p84 = por %p82, %p83
      %p85 = scmp.ne.s32.totalorder %s74, %s75
      %p86 = scmp.eq.s32.totalorder %s26, 0
      %p87 = por %p85, %p86
      %p88 = scmp.ne.s32.totalorder %s74, %s75
      %p89 = scmp.eq.s32.totalorder %s27, 2
      %p90 = por %p88, %p89
      %p92 = scmp.ne.s32.totalorder %s75, %s91
      %p93 = scmp.eq.s32.totalorder %s27, 0
      %p94 = por %p92, %p93
      %s96 = sadd.s32 %s95, 1
      %p99 = scmp.eq.s32.totalorder %s21, 2
      %p100 = scmp.ne.s32.totalorder %s95, %s97
      %p101 = scmp.eq.s32.totalorder %s21, 0
      %p102 = por %p100, %p101
      %p103 = scmp.ne.s32.totalorder %s95, %s97
      %p104 = scmp.eq.s32.totalorder %s26, 2
      %p105 = por %p103, %p104
      %p106 = scmp.ne.s32.totalorder %s97, %s98
      %p107 = scmp.eq.s32.totalorder %s26, 0
      %p108 = por %p106, %p107
      %p109 = scmp.ne.s32.totalorder %s97, %s98
      %p110 = scmp.eq.s32.totalorder %s27, 2
      %p111 = por %p109, %p110
      %p113 = scmp.ne.s32.totalorder %s98, %s112
      %p114 = scmp.eq.s32.totalorder %s27, 0
      %p115 = por %p113, %p114
      %s117 = sadd.s32 %s116, 1
      %p120 = scmp.eq.s32.totalorder %s21, 2
      %p121 = scmp.ne.s32.totalorder %s116, %s118
      %p122 = scmp.eq.s32.totalorder %s21, 0
      %p123 = por %p121, %p122
      %p124 = scmp.ne.s32.totalorder %s116, %s118
      %p125 = scmp.eq.s32.totalorder %s26, 2
      %p126 = por %p124, %p125
      %p127 = scmp.ne.s32.totalorder %s118, %s119
      %p128 = scmp.eq.s32.totalorder %s26, 0
      %p129 = por %p127, %p128
      %p130 = scmp.ne.s32.totalorder %s118, %s119
      %p131 = scmp.eq.s32.totalorder %s27, 2
      %p132 = por %p130, %p131
      %p134 = scmp.ne.s32.totalorder %s119, %s133
      %p135 = scmp.eq.s32.totalorder %s27, 0
      %p136 = por %p134, %p135
      %s138 = sadd.s32 %s137, 1
      %p141 = scmp.eq.s32.totalorder %s21, 2
      %p142 = scmp.ne.s32.totalorder %s137, %s139
      %p143 = scmp.eq.s32.totalorder %s21, 0
      %p144 = por %p142, %p143
      %p145 = scmp.ne.s32.totalorder %s137, %s139
      %p146 = scmp.eq.s32.totalorder %s26, 2
      %p147 = por %p145, %p146
      %p148 = scmp.ne.s32.totalorder %s139, %s140
      %p149 = scmp.eq.s32.totalorder %s26, 0
      %p150 = por %p148, %p149
      %p151 = scmp.ne.s32.totalorder %s139, %s140
      %p152 = scmp.eq.s32.totalorder %s27, 2
      %p153 = por %p151, %p152
      %p155 = scmp.ne.s32.totalorder %s140, %s154
      %p156 = scmp.eq.s32.totalorder %s27, 0
      %p157 = por %p155, %p156
      %s159 = sadd.s32 %s158, 1
      %p162 = scmp.eq.s32.totalorder %s21, 2
      %p163 = scmp.ne.s32.totalorder %s158, %s160
      %p164 = scmp.eq.s32.totalorder %s21, 0
      %p165 = por %p163, %p164
      %p166 = scmp.ne.s32.totalorder %s158, %s160
      %p167 = scmp.eq.s32.totalorder %s26, 2
      %p168 = por %p166, %p167
      %p169 = scmp.ne.s32.totalorder %s160, %s161
      %p170 = scmp.eq.s32.totalorder %s26, 0
      %p171 = por %p169, %p170
      %p172 = scmp.ne.s32.totalorder %s160, %s161
      %p173 = scmp.eq.s32.totalorder %s27, 2
      %p174 = por %p172, %p173
      %p176 = scmp.ne.s32.totalorder %s161, %s175
      %p177 = scmp.eq.s32.totalorder %s27, 0
      %p178 = por %p176, %p177
      %s180 = sadd.s32 %s179, 1
      %p183 = scmp.eq.s32.totalorder %s21, 2
      %p184 = scmp.ne.s32.totalorder %s179, %s181
      %p185 = scmp.eq.s32.totalorder %s21, 0
      %p186 = por %p184, %p185
      %p187 = scmp.ne.s32.totalorder %s179, %s181
      %p188 = scmp.eq.s32.totalorder %s26, 2
      %p189 = por %p187, %p188
      %p190 = scmp.ne.s32.totalorder %s181, %s182
      %p191 = scmp.eq.s32.totalorder %s26, 0
      %p192 = por %p190, %p191
      %p193 = scmp.ne.s32.totalorder %s181, %s182
      %p194 = scmp.eq.s32.totalorder %s27, 2
      %p195 = por %p193, %p194
      %p197 = scmp.ne.s32.totalorder %s182, %s196
      %p198 = scmp.eq.s32.totalorder %s27, 0
      %p199 = por %p197, %p198
      %s200 = ssub.s32 %s28, %s40
      %p201 = scmp.eq.s32.totalorder %s200, 0
      %s203 = sadd.s32 %s202, 1
      %s204 = scalar_select %p201, %s202, %s203
      %p207 = pneg %p201
      %p208 = scmp.eq.s32.totalorder %s21, 2
      %p209 = por %p207, %p208
      %p210 = scmp.ne.s32.totalorder %s202, %s205
      %p211 = scmp.eq.s32.totalorder %s21, 0
      %p212 = por %p210, %p211
      %p213 = scmp.ne.s32.totalorder %s202, %s205
      %p214 = scmp.eq.s32.totalorder %s26, 2
      %p215 = por %p213, %p214
      %p216 = scmp.ne.s32.totalorder %s205, %s206
      %p217 = scmp.eq.s32.totalorder %s26, 0
      %p218 = por %p216, %p217
      %p219 = scmp.ne.s32.totalorder %s205, %s206
      %p220 = scmp.eq.s32.totalorder %s27, 2
      %p221 = por %p219, %p220
      %p223 = scmp.ne.s32.totalorder %s206, %s222
      %p224 = scmp.eq.s32.totalorder %s27, 0
      %p225 = por %p223, %p224
      %p226 = scmp.le.s32.totalorder 1, %s21
      %p227 = scmp.lt.s32.totalorder %s21, 4
      %p228 = pnand %p226, %p227
      %p229 = pneg %p228
      // Predicated region
      $region9: #{tpu_custom_call.1} parent=5 // pred_check
        _
      $region10: #{tpu_custom_call.1} parent=5 // pred_check_branch
        %231 = sbr.rel (%p228) target = $region12
      $region11: #{tpu_custom_call.1} parent=5 // pred_region
        %s232 = ssub.s32 %s21, 1
        // Predicated region
        $region13: #{tpu_custom_call.1} parent=11 // pred_check
          %p233 = pneg %p108
        $region14: #{tpu_custom_call.1} parent=11 // pred_check_branch
          %235 = sbr.rel (%p233) target = $region16
        $region15: #{tpu_custom_call.1} parent=11 // pred_region
          _
        $region16: #{tpu_custom_call.1} parent=11 // pred_fallthru
          _
        // Predicated region
        $region17: #{tpu_custom_call.1} parent=11 // pred_check
          %p236 = pneg %p129
        $region18: #{tpu_custom_call.1} parent=11 // pred_check_branch
          %238 = sbr.rel (%p236) target = $region20
        $region19: #{tpu_custom_call.1} parent=11 // pred_region
          %s240 = ssub.s32 2048, 2048
          %241 = vsyncadd [#allocation7], %s240
          %s242 = sshll.u32 [#allocation8], 4
          %s243 = int_to_ptr.vmem [resolvable:$true] %s242
          %248 = dma.hbm_to_vmem [thread:$0]  %s3, 2048, %s243, [#allocation7], 128, 128, 8
        $region20: #{tpu_custom_call.1} parent=11 // pred_fallthru
          _
        // Predicated region
        $region21: #{tpu_custom_call.1} parent=11 // pred_check
          %p249 = pneg %p150
        $region22: #{tpu_custom_call.1} parent=11 // pred_check_branch
          %251 = sbr.rel (%p249) target = $region24
        $region23: #{tpu_custom_call.1} parent=11 // pred_region
          _
        $region24: #{tpu_custom_call.1} parent=11 // pred_fallthru
          _
        // Predicated region
        $region25: #{tpu_custom_call.1} parent=11 // pred_check
          %p252 = pneg %p171
        $region26: #{tpu_custom_call.1} parent=11 // pred_check_branch
          %254 = sbr.rel (%p252) target = $region28
        $region27: #{tpu_custom_call.1} parent=11 // pred_region
          %s256 = ssub.s32 2048, 2048
          %257 = vsyncadd [#allocation10], %s256
          %s258 = sshll.u32 [#allocation9], 4
          %s259 = int_to_ptr.vmem [resolvable:$true] %s258
          %264 = dma.hbm_to_vmem [thread:$0]  %s5, 2048, %s259, [#allocation10], 64, 64, 4
        $region28: #{tpu_custom_call.1} parent=11 // pred_fallthru
          _
        // Predicated region
        $region29: #{tpu_custom_call.1} parent=11 // pred_check
          %p265 = pneg %p192
        $region30: #{tpu_custom_call.1} parent=11 // pred_check_branch
          %267 = sbr.rel (%p265) target = $region32
        $region31: #{tpu_custom_call.1} parent=11 // pred_region
          _
        $region32: #{tpu_custom_call.1} parent=11 // pred_fallthru
          _
      $region12: #{tpu_custom_call.1} parent=5 // pred_fallthru
        _
      %p268 = scmp.lt.s32.totalorder %s21, 3
      // Predicated region
      $region33: #{tpu_custom_call.1} parent=5 // pred_check
        %p269 = pneg %p268
      $region34: #{tpu_custom_call.1} parent=5 // pred_check_branch
        %271 = sbr.rel (%p269) target = $region36
      $region35: #{tpu_custom_call.1} parent=5 // pred_region
        // Predicated region
        $region37: #{tpu_custom_call.1} parent=35 // pred_check
          %p272 = pneg %p55
        $region38: #{tpu_custom_call.1} parent=35 // pred_check_branch
          %274 = sbr.rel (%p272) target = $region40
        $region39: #{tpu_custom_call.1} parent=35 // pred_region
          %s275 = sand.u32 %s45, 1
          %s276 = scalar_lea.sflag [#allocation4], %s275
          %s277 = sand.u32 %s45, 1
          %s278 = smul.addr %s277, 16
          %s279 = scalar_lea.vmem [#allocation3], %s278
          %s280 = smul.u32 2, %s28
          %s281 = smul.u32 2, %s29
          %s283 = ssub.s32 256, 256
          %284 = vsyncadd %s276, %s283
          %s285 = smul.addr %s280, 6
          %s286 = sadd.s32 %s281, %s285
          %s287 = smul.addr %s286, 64
          %s288 = scalar_lea.hbm %s0, %s287
          %s289 = sshll.u32 %s279, 4
          %s290 = int_to_ptr.vmem [resolvable:$true] %s289
          %295 = dma.hbm_to_vmem [thread:$0]  %s288, 256, %s290, %s276, 384, 128, 8
        $region40: #{tpu_custom_call.1} parent=35 // pred_fallthru
          _
        // Predicated region
        $region41: #{tpu_custom_call.1} parent=35 // pred_check
          %p296 = pneg %p81
        $region42: #{tpu_custom_call.1} parent=35 // pred_check_branch
          %298 = sbr.rel (%p296) target = $region44
        $region43: #{tpu_custom_call.1} parent=35 // pred_region
          %s299 = sand.u32 %s21, 1
          %s300 = scalar_lea.sflag [#allocation7], %s299
          %s301 = sand.u32 %s71, 1
          %s302 = smul.addr %s301, 128
          %s303 = scalar_lea.vmem [#allocation6], %s302
          %s304 = smul.u32 32, %s29
          %s306 = ssub.s32 2048, 2048
          %307 = vsyncadd %s300, %s306
          %s308 = smul.addr %s304, 64
          %s309 = scalar_lea.hbm %s1, %s308
          %s310 = sshll.u32 %s303, 4
          %s311 = int_to_ptr.vmem [resolvable:$true] %s310
          %316 = dma.hbm_to_vmem [thread:$0]  %s309, 2048, %s311, %s300, 64, 64, 4
        $region44: #{tpu_custom_call.1} parent=35 // pred_fallthru
          _
      $region36: #{tpu_custom_call.1} parent=5 // pred_fallthru
        _
      %p317 = scmp.le.s32.totalorder 1, %s21
      %p318 = scmp.lt.s32.totalorder %s21, 4
      %p319 = pnand %p317, %p318
      %p320 = pneg %p319
      // Predicated region
      $region45: #{tpu_custom_call.1} parent=5 // pred_check
        _
      $region46: #{tpu_custom_call.1} parent=5 // pred_check_branch
        %322 = sbr.rel (%p319) target = $region48
      $region47: #{tpu_custom_call.1} parent=5 // pred_region
        %s323 = ssub.s32 %s21, 1
        %s324 = sand.u32 %s48, 1
        %s325 = scalar_lea.sflag [#allocation4], %s324
        %s326 = sand.u32 %s48, 1
        %s327 = smul.addr %s326, 16
        %s328 = scalar_lea.vmem [#allocation3], %s327
        // Predicated region
        $region49: #{tpu_custom_call.1} parent=47 // pred_check
          %p329 = pneg %p61
        $region50: #{tpu_custom_call.1} parent=47 // pred_check_branch
          %331 = sbr.rel (%p329) target = $region52
        $region51: #{tpu_custom_call.1} parent=47 // pred_region
          %332 = dma.done %s325, 256
        $region52: #{tpu_custom_call.1} parent=47 // pred_fallthru
          _
        %s333 = sand.u32 %s26, 1
        %s334 = scalar_lea.sflag [#allocation7], %s333
        %s335 = sand.u32 %s74, 1
        %s336 = smul.addr %s335, 128
        %s337 = scalar_lea.vmem [#allocation6], %s336
        // Predicated region
        $region53: #{tpu_custom_call.1} parent=47 // pred_check
          %p338 = pneg %p87
        $region54: #{tpu_custom_call.1} parent=47 // pred_check_branch
          %340 = sbr.rel (%p338) target = $region56
        $region55: #{tpu_custom_call.1} parent=47 // pred_region
          %341 = dma.done %s334, 2048
        $region56: #{tpu_custom_call.1} parent=47 // pred_fallthru
          _
        // Predicated region
        $region57: #{tpu_custom_call.1} parent=47 // pred_check
          %p342 = pneg %p129
        $region58: #{tpu_custom_call.1} parent=47 // pred_check_branch
          %344 = sbr.rel (%p342) target = $region60
        $region59: #{tpu_custom_call.1} parent=47 // pred_region
          %345 = dma.done [#allocation7], 2048
        $region60: #{tpu_custom_call.1} parent=47 // pred_fallthru
          _
        // Predicated region
        $region61: #{tpu_custom_call.1} parent=47 // pred_check
          %p346 = pneg %p171
        $region62: #{tpu_custom_call.1} parent=47 // pred_check_branch
          %348 = sbr.rel (%p346) target = $region64
        $region63: #{tpu_custom_call.1} parent=47 // pred_region
          %349 = dma.done [#allocation10], 2048
        $region64: #{tpu_custom_call.1} parent=47 // pred_fallthru
          _
        %s350 = sand.u32 %s48, 1
        %s351 = scalar_lea.sflag [#allocation4], %s350
        %s352 = sand.u32 %s48, 1
        %s353 = smul.addr %s352, 16
        %s354 = scalar_lea.vmem [#allocation3], %s353
        %p355 = pneg %p61
        %p356 = pneg %p58
        %s357 = sand.u32 %s26, 1
        %s358 = scalar_lea.sflag [#allocation7], %s357
        %s359 = sand.u32 %s74, 1
        %s360 = smul.addr %s359, 128
        %s361 = scalar_lea.vmem [#allocation6], %s360
        %p362 = pneg %p87
        %p363 = pneg %p84
        %p364 = pneg %p108
        %p365 = pneg %p105
        %p366 = pneg %p129
        %p367 = pneg %p126
        %p368 = pneg %p150
        %p369 = pneg %p147
        %p370 = pneg %p171
        %p371 = pneg %p168
        %p372 = pneg %p192
        %p373 = pneg %p189
        %p374 = pneg %p218
        %p375 = pneg %p215
        %s376 = smul.u32 2, %s30
        %s377 = smul.u32 2, %s31
        %s378 = smul.u32 32, %s31
        %s379 = smul.u32 2, %s30
        %p381 = scmp.eq.s32.totalorder %s31, 0
        // Predicated region
        $region65: #{tpu_custom_call.1} parent=47 // pred_check
          %p382 = pneg %p381
        $region66: #{tpu_custom_call.1} parent=47 // pred_check_branch
          %384 = sbr.rel (%p382) target = $region68
        $region67: #{tpu_custom_call.1} parent=47 // pred_region
          %385 = vst [vmem:[#allocation2] sm:$0xff] 0.0
          %386 = vst [vmem:[#allocation2 + $0x8] sm:$0xff] 0.0
        $region68: #{tpu_custom_call.1} parent=47 // pred_fallthru
          _
        %v387 = vld [vmem:[#allocation2] sm:$0xff]
        %v388 = vld [vmem:[#allocation2 + $0x8] sm:$0xff]
        %v389 = vld [vmem:[%s328] sm:$0xff]
        %v390 = vld [vmem:[%s328 + $0x8] sm:$0xff]
        %v391 = vld [vmem:[%s337] sm:$0xf]
        %v392 = vld [vmem:[%s337 + $0x4] sm:$0xf]
        %v393 = vld [vmem:[%s337 + $0x8] sm:$0xf]
        %v394 = vld [vmem:[%s337 + $0xc] sm:$0xf]
        %v395 = vld [vmem:[%s337 + $0x10] sm:$0xf]
        %v396 = vld [vmem:[%s337 + $0x14] sm:$0xf]
        %v397 = vld [vmem:[%s337 + $0x18] sm:$0xf]
        %v398 = vld [vmem:[%s337 + $0x1c] sm:$0xf]
        %v399 = vld [vmem:[%s337 + $0x20] sm:$0xf]
        %v400 = vld [vmem:[%s337 + $0x24] sm:$0xf]
        %v401 = vld [vmem:[%s337 + $0x28] sm:$0xf]
        %v402 = vld [vmem:[%s337 + $0x2c] sm:$0xf]
        %v403 = vld [vmem:[%s337 + $0x30] sm:$0xf]
        %v404 = vld [vmem:[%s337 + $0x34] sm:$0xf]
        %v405 = vld [vmem:[%s337 + $0x38] sm:$0xf]
        %v406 = vld [vmem:[%s337 + $0x3c] sm:$0xf]
        %v407 = vld [vmem:[%s337 + $0x40] sm:$0xf]
        %v408 = vld [vmem:[%s337 + $0x44] sm:$0xf]
        %v409 = vld [vmem:[%s337 + $0x48] sm:$0xf]
        %v410 = vld [vmem:[%s337 + $0x4c] sm:$0xf]
        %v411 = vld [vmem:[%s337 + $0x50] sm:$0xf]
        %v412 = vld [vmem:[%s337 + $0x54] sm:$0xf]
        %v413 = vld [vmem:[%s337 + $0x58] sm:$0xf]
        %v414 = vld [vmem:[%s337 + $0x5c] sm:$0xf]
        %v415 = vld [vmem:[%s337 + $0x60] sm:$0xf]
        %v416 = vld [vmem:[%s337 + $0x64] sm:$0xf]
        %v417 = vld [vmem:[%s337 + $0x68] sm:$0xf]
        %v418 = vld [vmem:[%s337 + $0x6c] sm:$0xf]
        %v419 = vld [vmem:[%s337 + $0x70] sm:$0xf]
        %v420 = vld [vmem:[%s337 + $0x74] sm:$0xf]
        %v421 = vld [vmem:[%s337 + $0x78] sm:$0xf]
        %v422 = vld [vmem:[%s337 + $0x7c] sm:$0xf]
        %v425 = vunpack.c.l.b16 %v389
        %v426 = vunpack.c.h.b16 %v389
        %v427 = vunpack.c.l.b16 %v390
        %v428 = vunpack.c.h.b16 %v390
        %v429 = vpack.c.b16 %v427, %v425
        %v430 = vpack.c.b16 %v428, %v426
        %v465 = vunpack.c.l.b16 %v391
        %v466 = vunpack.c.l.b16 %v392
        %v467 = vunpack.c.l.b16 %v393
        %v468 = vunpack.c.l.b16 %v394
        %v469 = vunpack.c.l.b16 %v395
        %v470 = vunpack.c.l.b16 %v396
        %v471 = vunpack.c.l.b16 %v397
        %v472 = vunpack.c.l.b16 %v398
        %v473 = vunpack.c.l.b16 %v399
        %v474 = vunpack.c.l.b16 %v400
        %v475 = vunpack.c.l.b16 %v401
        %v476 = vunpack.c.l.b16 %v402
        %v477 = vunpack.c.l.b16 %v403
        %v478 = vunpack.c.l.b16 %v404
        %v479 = vunpack.c.l.b16 %v405
        %v480 = vunpack.c.l.b16 %v406
        %v481 = vunpack.c.l.b16 %v407
        %v482 = vunpack.c.l.b16 %v408
        %v483 = vunpack.c.l.b16 %v409
        %v484 = vunpack.c.l.b16 %v410
        %v485 = vunpack.c.l.b16 %v411
        %v486 = vunpack.c.l.b16 %v412
        %v487 = vunpack.c.l.b16 %v413
        %v488 = vunpack.c.l.b16 %v414
        %v489 = vunpack.c.l.b16 %v415
        %v490 = vunpack.c.l.b16 %v416
        %v491 = vunpack.c.l.b16 %v417
        %v492 = vunpack.c.l.b16 %v418
        %v493 = vunpack.c.l.b16 %v419
        %v494 = vunpack.c.l.b16 %v420
        %v495 = vunpack.c.l.b16 %v421
        %v496 = vunpack.c.l.b16 %v422
        %v497 = vpack.c.b16 %v466, %v465
        %v498 = vpack.c.b16 %v468, %v467
        %v499 = vpack.c.b16 %v470, %v469
        %v500 = vpack.c.b16 %v472, %v471
        %v501 = vpack.c.b16 %v474, %v473
        %v502 = vpack.c.b16 %v476, %v475
        %v503 = vpack.c.b16 %v478, %v477
        %v504 = vpack.c.b16 %v480, %v479
        %v505 = vpack.c.b16 %v482, %v481
        %v506 = vpack.c.b16 %v484, %v483
        %v507 = vpack.c.b16 %v486, %v485
        %v508 = vpack.c.b16 %v488, %v487
        %v509 = vpack.c.b16 %v490, %v489
        %v510 = vpack.c.b16 %v492, %v491
        %v511 = vpack.c.b16 %v494, %v493
        %v512 = vpack.c.b16 %v496, %v495
        %529 = vmatprep.subr.bf16.mxu0 0
        %530 = vmatpush1.bf16.msra.mxu0 %v497
        %531 = vmatprep.subr.bf16.mxu0 0
        %532 = vmatpush1.bf16.msra.mxu0 %v498
        %533 = vmatprep.subr.bf16.mxu0 0
        %534 = vmatpush1.bf16.msra.mxu0 %v499
        %535 = vmatprep.subr.bf16.mxu0 0
        %536 = vmatpush1.bf16.msra.mxu0 %v500
        %537 = vmatprep.subr.bf16.mxu0 0
        %538 = vmatpush1.bf16.msra.mxu0 %v501
        %539 = vmatprep.subr.bf16.mxu0 0
        %540 = vmatpush1.bf16.msra.mxu0 %v502
        %541 = vmatprep.subr.bf16.mxu0 0
        %542 = vmatpush1.bf16.msra.mxu0 %v503
        %543 = vmatprep.subr.bf16.mxu0 0
        %544 = vmatpush1.bf16.msra.mxu0 %v504
        %545 = vmatprep.subr.bf16.mxu0 0
        %546 = vmatpush1.bf16.msra.mxu0 %v505
        %547 = vmatprep.subr.bf16.mxu0 0
        %548 = vmatpush1.bf16.msra.mxu0 %v506
        %549 = vmatprep.subr.bf16.mxu0 0
        %550 = vmatpush1.bf16.msra.mxu0 %v507
        %551 = vmatprep.subr.bf16.mxu0 0
        %552 = vmatpush1.bf16.msra.mxu0 %v508
        %553 = vmatprep.subr.bf16.mxu0 0
        %554 = vmatpush1.bf16.msra.mxu0 %v509
        %555 = vmatprep.subr.bf16.mxu0 0
        %556 = vmatpush1.bf16.msra.mxu0 %v510
        %557 = vmatprep.subr.bf16.mxu0 0
        %558 = vmatpush1.bf16.msra.mxu0 %v511
        %559 = vmatprep.subr.bf16.mxu0 0
        %560 = vmatpush1.bf16.msra.mxu0 %v512
        %561 = vmatprep.mubr.bf16.mxu0 %v430
        %562 = vmatmul.mubr.bf16.gmra.mrb[0].mxu0 %v429
        %v563 = vpop.f32.mrb[0].mxu0
        %v564 = vadd.f32 0.0, %v563
        %v565 = vpop.f32.mrb[0].mxu0
        %v566 = vpop.f32.mrb[0].mxu0
        %v567 = vadd.f32 0.0, %v566
        %v568 = vpop.f32.mrb[0].mxu0
        %569 = vdwg.mxu0
        %v570 = vadd.f32 %v387, %v564
        %v571 = vadd.f32 %v388, %v567
        %572 = vst [vmem:[#allocation2] sm:$0xff] %v570
        %573 = vst [vmem:[#allocation2 + $0x8] sm:$0xff] %v571
        %p574 = scmp.eq.s32.totalorder %s31, 2
        // Predicated region
        $region69: #{tpu_custom_call.1} parent=47 // pred_check
          %p575 = pneg %p574
        $region70: #{tpu_custom_call.1} parent=47 // pred_check_branch
          %577 = sbr.rel (%p575) target = $region72
        $region71: #{tpu_custom_call.1} parent=47 // pred_region
          %v578 = vld [vmem:[#allocation2] sm:$0xff]
          %v579 = vld [vmem:[#allocation2 + $0x8] sm:$0xff]
          %v580 = vld [vmem:[%s2] sm:$0x1]
          %v582 = vlaneseq
          %v583 = vshrl.u32 %v582, 7
          %v584 = vsub.s32 0, %v583
          %v585 = vrot.slane %v580, %v584
          %v587 = vadd.f32 %v578, %v585
          %v588 = vadd.f32 %v579, %v585
          %v589 = vmax.f32 %v587, 0.0
          %v590 = vmax.f32 %v588, 0.0
          %v591 = vpack.c.bf16 %v590, %v589
          %v592 = vld [vmem:[#allocation8] sm:$0xff]
          %v593 = vld [vmem:[#allocation8 + $0x8] sm:$0xff]
          %v594 = vld [vmem:[#allocation8 + $0x10] sm:$0xff]
          %v595 = vld [vmem:[#allocation8 + $0x18] sm:$0xff]
          %v596 = vld [vmem:[#allocation8 + $0x20] sm:$0xff]
          %v597 = vld [vmem:[#allocation8 + $0x28] sm:$0xff]
          %v598 = vld [vmem:[#allocation8 + $0x30] sm:$0xff]
          %v599 = vld [vmem:[#allocation8 + $0x38] sm:$0xff]
          %v600 = vld [vmem:[#allocation8 + $0x40] sm:$0xff]
          %v601 = vld [vmem:[#allocation8 + $0x48] sm:$0xff]
          %v602 = vld [vmem:[#allocation8 + $0x50] sm:$0xff]
          %v603 = vld [vmem:[#allocation8 + $0x58] sm:$0xff]
          %v604 = vld [vmem:[#allocation8 + $0x60] sm:$0xff]
          %v605 = vld [vmem:[#allocation8 + $0x68] sm:$0xff]
          %v606 = vld [vmem:[#allocation8 + $0x70] sm:$0xff]
          %v607 = vld [vmem:[#allocation8 + $0x78] sm:$0xff]
          %v608 = vld [vmem:[%s4] sm:$0x3]
          %v610 = vlaneseq
          %v611 = vshrl.u32 %v610, 7
          %v612 = vsub.s32 0, %v611
          %v613 = vrot.slane %v608, %v612
          %v614 = vlaneseq
          %v615 = vshrl.u32 %v614, 7
          %v616 = vsub.s32 1, %v615
          %v617 = vrot.slane %v608, %v616
          %v636 = vunpack.c.l.b16 %v592
          %v637 = vunpack.c.h.b16 %v592
          %v638 = vunpack.c.l.b16 %v593
          %v639 = vunpack.c.h.b16 %v593
          %v640 = vunpack.c.l.b16 %v594
          %v641 = vunpack.c.h.b16 %v594
          %v642 = vunpack.c.l.b16 %v595
          %v643 = vunpack.c.h.b16 %v595
          %v644 = vunpack.c.l.b16 %v596
          %v645 = vunpack.c.h.b16 %v596
          %v646 = vunpack.c.l.b16 %v597
          %v647 = vunpack.c.h.b16 %v597
          %v648 = vunpack.c.l.b16 %v598
          %v649 = vunpack.c.h.b16 %v598
          %v650 = vunpack.c.l.b16 %v599
          %v651 = vunpack.c.h.b16 %v599
          %v652 = vunpack.c.l.b16 %v600
          %v653 = vunpack.c.h.b16 %v600
          %v654 = vunpack.c.l.b16 %v601
          %v655 = vunpack.c.h.b16 %v601
          %v656 = vunpack.c.l.b16 %v602
          %v657 = vunpack.c.h.b16 %v602
          %v658 = vunpack.c.l.b16 %v603
          %v659 = vunpack.c.h.b16 %v603
          %v660 = vunpack.c.l.b16 %v604
          %v661 = vunpack.c.h.b16 %v604
          %v662 = vunpack.c.l.b16 %v605
          %v663 = vunpack.c.h.b16 %v605
          %v664 = vunpack.c.l.b16 %v606
          %v665 = vunpack.c.h.b16 %v606
          %v666 = vunpack.c.l.b16 %v607
          %v667 = vunpack.c.h.b16 %v607
          %v668 = vpack.c.b16 %v638, %v636
          %v669 = vpack.c.b16 %v639, %v637
          %v670 = vpack.c.b16 %v642, %v640
          %v671 = vpack.c.b16 %v643, %v641
          %v672 = vpack.c.b16 %v646, %v644
          %v673 = vpack.c.b16 %v647, %v645
          %v674 = vpack.c.b16 %v650, %v648
          %v675 = vpack.c.b16 %v651, %v649
          %v676 = vpack.c.b16 %v654, %v652
          %v677 = vpack.c.b16 %v655, %v653
          %v678 = vpack.c.b16 %v658, %v656
          %v679 = vpack.c.b16 %v659, %v657
          %v680 = vpack.c.b16 %v662, %v660
          %v681 = vpack.c.b16 %v663, %v661
          %v682 = vpack.c.b16 %v666, %v664
          %v683 = vpack.c.b16 %v667, %v665
          %700 = vmatprep.subr.bf16.mxu0 %v669
          %701 = vmatpush1.bf16.msra.mxu0 %v668
          %702 = vmatprep.subr.bf16.mxu0 %v671
          %703 = vmatpush1.bf16.msra.mxu0 %v670
          %704 = vmatprep.subr.bf16.mxu0 %v673
          %705 = vmatpush1.bf16.msra.mxu0 %v672
          %706 = vmatprep.subr.bf16.mxu0 %v675
          %707 = vmatpush1.bf16.msra.mxu0 %v674
          %708 = vmatprep.subr.bf16.mxu0 %v677
          %709 = vmatpush1.bf16.msra.mxu0 %v676
          %710 = vmatprep.subr.bf16.mxu0 %v679
          %711 = vmatpush1.bf16.msra.mxu0 %v678
          %712 = vmatprep.subr.bf16.mxu0 %v681
          %713 = vmatpush1.bf16.msra.mxu0 %v680
          %714 = vmatprep.subr.bf16.mxu0 %v683
          %715 = vmatpush1.bf16.msra.mxu0 %v682
          %716 = vmatprep.subr.bf16.mxu0 0
          %717 = vmatpush1.bf16.msra.mxu0 0
          %718 = vmatprep.subr.bf16.mxu0 0
          %719 = vmatpush1.bf16.msra.mxu0 0
          %720 = vmatprep.subr.bf16.mxu0 0
          %721 = vmatpush1.bf16.msra.mxu0 0
          %722 = vmatprep.subr.bf16.mxu0 0
          %723 = vmatpush1.bf16.msra.mxu0 0
          %724 = vmatprep.subr.bf16.mxu0 0
          %725 = vmatpush1.bf16.msra.mxu0 0
          %726 = vmatprep.subr.bf16.mxu0 0
          %727 = vmatpush1.bf16.msra.mxu0 0
          %728 = vmatprep.subr.bf16.mxu0 0
          %729 = vmatpush1.bf16.msra.mxu0 0
          %730 = vmatprep.subr.bf16.mxu0 0
          %731 = vmatpush1.bf16.msra.mxu0 0
          %732 = vmatprep.mubr.bf16.mxu0 0
          %733 = vmatmul.mubr.bf16.gmra.mrb[0].mxu0 %v591
          %v734 = vpop.f32.mrb[0].mxu0
          %v735 = vadd.f32 %v613, %v734
          %v736 = vpop.f32.mrb[0].mxu0
          %v737 = vadd.f32 %v617, %v736
          %v738 = vpop.f32.mrb[0].mxu0
          %v739 = vadd.f32 %v613, %v738
          %v740 = vpop.f32.mrb[0].mxu0
          %v741 = vadd.f32 %v617, %v740
          %742 = vdwg.mxu0
          %v743 = vmax.f32 %v735, 0.0
          %v744 = vmax.f32 %v737, 0.0
          %v745 = vmax.f32 %v739, 0.0
          %v746 = vmax.f32 %v741, 0.0
          %v747 = vpack.c.bf16 %v745, %v743
          %v748 = vpack.c.bf16 %v746, %v744
          %v749 = vld [vmem:[#allocation9] sm:$0xf]
          %v750 = vld [vmem:[#allocation9 + $0x4] sm:$0xf]
          %v751 = vld [vmem:[#allocation9 + $0x8] sm:$0xf]
          %v752 = vld [vmem:[#allocation9 + $0xc] sm:$0xf]
          %v753 = vld [vmem:[#allocation9 + $0x10] sm:$0xf]
          %v754 = vld [vmem:[#allocation9 + $0x14] sm:$0xf]
          %v755 = vld [vmem:[#allocation9 + $0x18] sm:$0xf]
          %v756 = vld [vmem:[#allocation9 + $0x1c] sm:$0xf]
          %v757 = vld [vmem:[#allocation9 + $0x20] sm:$0xf]
          %v758 = vld [vmem:[#allocation9 + $0x24] sm:$0xf]
          %v759 = vld [vmem:[#allocation9 + $0x28] sm:$0xf]
          %v760 = vld [vmem:[#allocation9 + $0x2c] sm:$0xf]
          %v761 = vld [vmem:[#allocation9 + $0x30] sm:$0xf]
          %v762 = vld [vmem:[#allocation9 + $0x34] sm:$0xf]
          %v763 = vld [vmem:[#allocation9 + $0x38] sm:$0xf]
          %v764 = vld [vmem:[#allocation9 + $0x3c] sm:$0xf]
          %v765 = vld [vmem:[#allocation9 + $0x40] sm:$0xf]
          %v766 = vld [vmem:[#allocation9 + $0x44] sm:$0xf]
          %v767 = vld [vmem:[#allocation9 + $0x48] sm:$0xf]
          %v768 = vld [vmem:[#allocation9 + $0x4c] sm:$0xf]
          %v769 = vld [vmem:[#allocation9 + $0x50] sm:$0xf]
          %v770 = vld [vmem:[#allocation9 + $0x54] sm:$0xf]
          %v771 = vld [vmem:[#allocation9 + $0x58] sm:$0xf]
          %v772 = vld [vmem:[#allocation9 + $0x5c] sm:$0xf]
          %v773 = vld [vmem:[#allocation9 + $0x60] sm:$0xf]
          %v774 = vld [vmem:[#allocation9 + $0x64] sm:$0xf]
          %v775 = vld [vmem:[#allocation9 + $0x68] sm:$0xf]
          %v776 = vld [vmem:[#allocation9 + $0x6c] sm:$0xf]
          %v777 = vld [vmem:[#allocation9 + $0x70] sm:$0xf]
          %v778 = vld [vmem:[#allocation9 + $0x74] sm:$0xf]
          %v779 = vld [vmem:[#allocation9 + $0x78] sm:$0xf]
          %v780 = vld [vmem:[#allocation9 + $0x7c] sm:$0xf]
          %v781 = vld [vmem:[%s6] sm:$0x1]
          %v783 = vlaneseq
          %v784 = vshrl.u32 %v783, 7
          %v785 = vsub.s32 0, %v784
          %v786 = vrot.slane %v781, %v785
          %v820 = vunpack.c.l.b16 %v749
          %v821 = vunpack.c.l.b16 %v750
          %v822 = vunpack.c.l.b16 %v751
          %v823 = vunpack.c.l.b16 %v752
          %v824 = vunpack.c.l.b16 %v753
          %v825 = vunpack.c.l.b16 %v754
          %v826 = vunpack.c.l.b16 %v755
          %v827 = vunpack.c.l.b16 %v756
          %v828 = vunpack.c.l.b16 %v757
          %v829 = vunpack.c.l.b16 %v758
          %v830 = vunpack.c.l.b16 %v759
          %v831 = vunpack.c.l.b16 %v760
          %v832 = vunpack.c.l.b16 %v761
          %v833 = vunpack.c.l.b16 %v762
          %v834 = vunpack.c.l.b16 %v763
          %v835 = vunpack.c.l.b16 %v764
          %v836 = vunpack.c.l.b16 %v765
          %v837 = vunpack.c.l.b16 %v766
          %v838 = vunpack.c.l.b16 %v767
          %v839 = vunpack.c.l.b16 %v768
          %v840 = vunpack.c.l.b16 %v769
          %v841 = vunpack.c.l.b16 %v770
          %v842 = vunpack.c.l.b16 %v771
          %v843 = vunpack.c.l.b16 %v772
          %v844 = vunpack.c.l.b16 %v773
          %v845 = vunpack.c.l.b16 %v774
          %v846 = vunpack.c.l.b16 %v775
          %v847 = vunpack.c.l.b16 %v776
          %v848 = vunpack.c.l.b16 %v777
          %v849 = vunpack.c.l.b16 %v778
          %v850 = vunpack.c.l.b16 %v779
          %v851 = vunpack.c.l.b16 %v780
          %v852 = vpack.c.b16 %v821, %v820
          %v853 = vpack.c.b16 %v823, %v822
          %v854 = vpack.c.b16 %v825, %v824
          %v855 = vpack.c.b16 %v827, %v826
          %v856 = vpack.c.b16 %v829, %v828
          %v857 = vpack.c.b16 %v831, %v830
          %v858 = vpack.c.b16 %v833, %v832
          %v859 = vpack.c.b16 %v835, %v834
          %v860 = vpack.c.b16 %v837, %v836
          %v861 = vpack.c.b16 %v839, %v838
          %v862 = vpack.c.b16 %v841, %v840
          %v863 = vpack.c.b16 %v843, %v842
          %v864 = vpack.c.b16 %v845, %v844
          %v865 = vpack.c.b16 %v847, %v846
          %v866 = vpack.c.b16 %v849, %v848
          %v867 = vpack.c.b16 %v851, %v850
          %884 = vmatprep.subr.bf16.mxu0 0
          %885 = vmatpush1.bf16.msra.mxu0 %v852
          %886 = vmatprep.subr.bf16.mxu0 0
          %887 = vmatpush1.bf16.msra.mxu0 %v853
          %888 = vmatprep.subr.bf16.mxu0 0
          %889 = vmatpush1.bf16.msra.mxu0 %v854
          %890 = vmatprep.subr.bf16.mxu0 0
          %891 = vmatpush1.bf16.msra.mxu0 %v855
          %892 = vmatprep.subr.bf16.mxu0 0
          %893 = vmatpush1.bf16.msra.mxu0 %v856
          %894 = vmatprep.subr.bf16.mxu0 0
          %895 = vmatpush1.bf16.msra.mxu0 %v857
          %896 = vmatprep.subr.bf16.mxu0 0
          %897 = vmatpush1.bf16.msra.mxu0 %v858
          %898 = vmatprep.subr.bf16.mxu0 0
          %899 = vmatpush1.bf16.msra.mxu0 %v859
          %900 = vmatprep.subr.bf16.mxu0 0
          %901 = vmatpush1.bf16.msra.mxu0 %v860
          %902 = vmatprep.subr.bf16.mxu0 0
          %903 = vmatpush1.bf16.msra.mxu0 %v861
          %904 = vmatprep.subr.bf16.mxu0 0
          %905 = vmatpush1.bf16.msra.mxu0 %v862
          %906 = vmatprep.subr.bf16.mxu0 0
          %907 = vmatpush1.bf16.msra.mxu0 %v863
          %908 = vmatprep.subr.bf16.mxu0 0
          %909 = vmatpush1.bf16.msra.mxu0 %v864
          %910 = vmatprep.subr.bf16.mxu0 0
          %911 = vmatpush1.bf16.msra.mxu0 %v865
          %912 = vmatprep.subr.bf16.mxu0 0
          %913 = vmatpush1.bf16.msra.mxu0 %v866
          %914 = vmatprep.subr.bf16.mxu0 0
          %915 = vmatpush1.bf16.msra.mxu0 %v867
          %916 = vmatprep.mubr.bf16.mxu0 %v748
          %917 = vmatmul.mubr.bf16.gmra.mrb[0].mxu0 %v747
          %v918 = vpop.f32.mrb[0].mxu0
          %v919 = vadd.f32 %v786, %v918
          %v920 = vpop.f32.mrb[0].mxu0
          %v921 = vpop.f32.mrb[0].mxu0
          %v922 = vadd.f32 %v786, %v921
          %v923 = vpop.f32.mrb[0].mxu0
          %924 = vdwg.mxu0
          %925 = vst [vmem:[#allocation11] sm:$0xff] %v919
          %926 = vst [vmem:[#allocation11 + $0x8] sm:$0xff] %v922
        $region72: #{tpu_custom_call.1} parent=47 // pred_fallthru
          _
        // Predicated region
        $region73: #{tpu_custom_call.1} parent=47 // pred_check
          %p927 = pneg %p215
        $region74: #{tpu_custom_call.1} parent=47 // pred_check_branch
          %929 = sbr.rel (%p927) target = $region76
        $region75: #{tpu_custom_call.1} parent=47 // pred_region
          %s930 = smul.u32 2, %s30
          %s932 = ssub.s32 256, 256
          %933 = vsyncadd [#allocation5], %s932
          %s934 = smul.addr %s930, 128
          %s935 = scalar_lea.hbm %s7, %s934
          %s936 = sshll.u32 [#allocation11], 4
          %s937 = int_to_ptr.vmem [resolvable:$true] %s936
          %942 = dma.vmem_to_hbm [thread:$0]  %s937, 256, %s935, [#allocation5], 128, 128, 8
        $region76: #{tpu_custom_call.1} parent=47 // pred_fallthru
          _
        // Predicated region
        $region77: #{tpu_custom_call.1} parent=47 // pred_check
          %p943 = pneg %p215
        $region78: #{tpu_custom_call.1} parent=47 // pred_check_branch
          %945 = sbr.rel (%p943) target = $region80
        $region79: #{tpu_custom_call.1} parent=47 // pred_region
          %946 = dma.done [#allocation5], 256
        $region80: #{tpu_custom_call.1} parent=47 // pred_fallthru
          _
      $region48: #{tpu_custom_call.1} parent=5 // pred_fallthru
        _
      %p947 = scmp.le.s32.totalorder 2, %s21
      // Predicated region
      $region81: #{tpu_custom_call.1} parent=5 // pred_check
        %p948 = pneg %p947
      $region82: #{tpu_custom_call.1} parent=5 // pred_check_branch
        %950 = sbr.rel (%p948) target = $region84
      $region83: #{tpu_custom_call.1} parent=5 // pred_region
        %s951 = ssub.s32 %s21, 2
      $region84: #{tpu_custom_call.1} parent=5 // pred_fallthru
        _
    $region6: #{tpu_custom_call.1} parent=1 // loop_footer
      %s25 = sadd.s32 1, %s21
    $region7: #{tpu_custom_call.1} parent=1 // loop_footer_branch
      %20 = sbr.rel target = $region3
    $region8: #{tpu_custom_call.1} parent=1 // loop_exit
      _
    %952 = vsyncpa [#allocation4], 1
    %s953 = scalar_lea.sflag [#allocation4], 1
    %954 = vsyncpa %s953, 1
    %955 = vsyncpa [#allocation7], 1
    %s956 = scalar_lea.sflag [#allocation7], 1
    %957 = vsyncpa %s956, 1
    %958 = vsyncpa [#allocation10], 1
    %959 = vsyncpa [#allocation5], 1
    %s960 = scalar_lea.sflag [#allocation5], 1
    %961 = vsyncpa %s960, 1

</llo_original>
